<compile_context>
chip_gen: v7x
topology: tpu7x:2x2x1
jax: 0.10.0
libtpu: 0.0.40
codegen_flags: <defaults>
</compile_context>

<pallas_src>
import functools
import math

import jax
import jax.numpy as jnp
from jax.experimental import pallas as pl
from jax.experimental.pallas import tpu as pltpu

_MASK_VAL = -1e30     # logit fill for non-edges
_M_FLOOR = -1e20      # running-max floor -> masked exp underflows to exactly 0
_LEAKY_SLOPE = 0.2    # PyG GATConv default negative_slope


def _round_up(x, m):
    return (x + m - 1) // m * m


def _pick_tiles(n):
    """tk=512 on all generations (per-step VMEM footprint is a few MiB, far below
    even the default scoped limit); tm=256 when that still leaves >=2 dst tiles
    so both v7x TensorCores get work under dimension_semantics=('parallel',...)."""
    n128 = _round_up(max(n, 1), 128)
    tk = min(512, n128)
    tm = 256 if n128 >= 512 else min(128, n128)
    return tm, tk


def _use_bf16_exp():
    """bf16 EUP exists on v6e/v7x; on v5e (and older) a bf16 exp only adds casts."""
    try:
        kind = jax.devices()[0].device_kind.lower()
    except Exception:
        return False
    return ("v6" in kind) or ("v7" in kind)


# --------------------------- kernel 1: projection ---------------------------
def _proj_kernel(x_ref, w_ref, xl_ref, a_ref):
    # Single bf16 MXU matmul with f32 accumulation.  W_ext = [W | W @ att_mat] is
    # folded in the wrapper, so both per-head logit contributions come out of the
    # same matmul (no tiny serially-dependent second matmul).
    hc = xl_ref.shape[1]
    y = jnp.dot(x_ref[...].astype(jnp.bfloat16), w_ref[...],
                preferred_element_type=jnp.float32)          # [Tm, HC + 2H]
    xl_ref[...] = y[:, :hc].astype(jnp.bfloat16)             # bf16 -> halves kernel-2 stream
    a_ref[...] = y[:, hc:]                                    # logit contributions, f32


def _project(x_pad, w_ext, hc, two_h, *, tm):
    n_pad, f_in = x_pad.shape
    cost = pl.CostEstimate(
        flops=2 * n_pad * f_in * (hc + two_h),
        transcendentals=0,
        bytes_accessed=(4 * n_pad * f_in + 2 * f_in * (hc + two_h)
                        + 2 * n_pad * hc + 4 * n_pad * two_h))
    return pl.pallas_call(
        _proj_kernel,
        out_shape=(jax.ShapeDtypeStruct((n_pad, hc), jnp.bfloat16),
                   jax.ShapeDtypeStruct((n_pad, two_h), jnp.float32)),
        grid_spec=pltpu.PrefetchScalarGridSpec(
            num_scalar_prefetch=0,
            grid=(n_pad // tm,),
            in_specs=[
                pl.BlockSpec((tm, f_in), lambda i: (i, 0)),
                pl.BlockSpec((f_in, hc + two_h), lambda i: (0, 0)),
            ],
            out_specs=[
                pl.BlockSpec((tm, hc), lambda i: (i, 0)),
                pl.BlockSpec((tm, two_h), lambda i: (i, 0)),
            ]),
        compiler_params=pltpu.CompilerParams(dimension_semantics=("parallel",)),
        cost_estimate=cost,
    )(x_pad, w_ext)


# ----------------- kernel 2: masked softmax attention + ELU -----------------
def _gat_attn_kernel(nnz_ref, adst_ref, asrcT_ref, adj_ref, xl_ref, bias_ref,
                     out_ref, m_scr, l_scr, acc_scr,
                     *, heads, out_chnl, concat, bf16_exp):
    H, C = heads, out_chnl
    i = pl.program_id(0)
    k = pl.program_id(1)
    nk = pl.num_programs(1)
    tm = acc_scr.shape[0]
    hc_pad = acc_scr.shape[1]

    @pl.when(k == 0)
    def _init():
        m_scr[...] = jnp.full(m_scr.shape, _M_FLOOR, jnp.float32)
        l_scr[...] = jnp.zeros(l_scr.shape, jnp.float32)
        acc_scr[...] = jnp.zeros(acc_scr.shape, jnp.float32)

    # Interim block-sparse path: skip all compute on src blocks holding no edges
    # for this dst tile (skipping zero contributions is exact).
    @pl.when(nnz_ref[i, k] > 0)
    def _compute():
        valid = adj_ref[...] != 0                           # [Tm, Tk] bool
        mask_bias = jnp.where(valid, 0.0, _MASK_VAL)        # hoisted out of head loop
        a_dst = adst_ref[...]                               # [Tm, H]  f32
        a_srcT = asrcT_ref[...]                             # [H, Tk]  f32
        xl = xl_ref[...]                                    # [Tk, H*C] bf16

        m_old = m_scr[...]                                  # [Tm, H]
        e_list, m_cols = [], []
        for h in range(H):
            e = a_dst[:, h:h + 1] + a_srcT[h:h + 1, :]      # [Tm, Tk]
            # slope < 1  =>  max(e, slope*e) == LeakyReLU(e, slope)
            e = jnp.maximum(e, _LEAKY_SLOPE * e) + mask_bias
            e_list.append(e)
            m_cols.append(jnp.max(e, axis=-1, keepdims=True))
        m_new = jnp.maximum(m_old, jnp.concatenate(m_cols, axis=-1))   # [Tm, H]
        corr = jnp.exp(m_old - m_new)                       # [Tm, H]  f32 (exact)

        sum_cols, upd_cols = [], []
        for h in range(H):
            d = e_list[h] - m_new[:, h:h + 1]               # f32
            # masked entries: d ~ -1e30 (m_new >= -1e20 floor) -> exp underflows
            # to exactly 0 in both f32 and bf16; no post-exp mask multiply needed.
            p = jnp.exp(d.astype(jnp.bfloat16)) if bf16_exp else jnp.exp(d)
            sum_cols.append(jnp.sum(p.astype(jnp.float32), axis=-1, keepdims=True))
            upd_cols.append(jnp.dot(p.astype(jnp.bfloat16), xl[:, h * C:(h + 1) * C],
                                    preferred_element_type=jnp.float32))
        l_scr[...] = corr * l_scr[...] + jnp.concatenate(sum_cols, axis=-1)
        m_scr[...] = m_new

        # One lane-dense accumulator RMW per src step (instead of H masked ones).
        corr_cols = [jnp.broadcast_to(corr[:, h:h + 1], (tm, C)) for h in range(H)]
        if hc_pad > H * C:
            pad = hc_pad - H * C
            corr_cols.append(jnp.zeros((tm, pad), jnp.float32))
            upd_cols.append(jnp.zeros((tm, pad), jnp.float32))
        acc_scr[...] = (jnp.concatenate(corr_cols, axis=-1) * acc_scr[...]
                        + jnp.concatenate(upd_cols, axis=-1))

    @pl.when(k == nk - 1)
    def _finalize():
        out_pad = out_ref.shape[1]
        inv = pl.reciprocal(jnp.maximum(l_scr[...], 1e-20), approx=True)  # [Tm, H]
        acc = acc_scr[...]
        if concat:
            inv_cols = [jnp.broadcast_to(inv[:, h:h + 1], (tm, C)) for h in range(H)]
            if hc_pad > H * C:
                inv_cols.append(jnp.zeros((tm, hc_pad - H * C), jnp.float32))
            y = acc * jnp.concatenate(inv_cols, axis=-1)     # hc_pad == out_pad here
        else:
            mean = jnp.zeros((tm, C), jnp.float32)
            for h in range(H):
                mean = mean + acc[:, h * C:(h + 1) * C] * inv[:, h:h + 1]
            y = mean * (1.0 / H)
            if out_pad > C:
                y = jnp.concatenate(
                    [y, jnp.zeros((tm, out_pad - C), jnp.float32)], axis=-1)
        y = y + bias_ref[...]                                # bias pre-padded to out_pad
        out_ref[...] = jnp.where(y > 0, y, jnp.exp(y) - 1.0)  # ELU(alpha=1)


# ------------------------------- wrapper -------------------------------------
def gat_layer(h_node, edge_index, params, *, heads, out_chnl, concat,
              tile_dst=None, tile_src=None):
    """GATlayer.forward equivalent (inference). h_node: [N, F_in], edge_index: [2, E]."""
    N, f_in = h_node.shape
    H, C = heads, out_chnl
    out_dim = H * C if concat else C

    tm_auto, tk_auto = _pick_tiles(N)
    tm = tile_dst or tm_auto
    tk = tile_src or tk_auto
    n_pad = _round_up(N, math.lcm(tm, tk))
    out_pad = _round_up(out_dim, 128)
    hc_pad = _round_up(H * C, 128)

    # --- glue (plain XLA): self loops, dense int8 adjacency, per-block counts ---
    loops = jnp.arange(N, dtype=edge_index.dtype)
    ei = jnp.concatenate([edge_index, jnp.stack([loops, loops])], axis=1)
    src, dst = ei[0], ei[1]
    adj = jnp.zeros((n_pad, n_pad), jnp.int8).at[dst, src].set(1)     # adj[dst, src]
    gi, gk = n_pad // tm, n_pad // tk
    nnz = jnp.zeros((gi, gk), jnp.int32).at[
        (dst // tm).astype(jnp.int32), (src // tk).astype(jnp.int32)].add(1)
    # TODO(synk): full block-sparse path — scalar-prefetch per-dst-tile lists of
    # nonzero src blocks and use them in the adj/xl/a_srcT index_maps so empty
    # blocks are never DMA'd at all (currently they are fetched but not computed).

    x_pad = jnp.zeros((n_pad, f_in), jnp.float32).at[:N].set(
        h_node.astype(jnp.float32))

    # Block-diagonal attention matrix folded into W: columns [0:H] -> att_src,
    # [H:2H] -> att_dst, so a single matmul yields xl and both logit contributions.
    att_mat = jnp.zeros((H * C, 2 * H), jnp.float32)
    for h in range(H):
        att_mat = att_mat.at[h * C:(h + 1) * C, h].set(params["att_src"][h])
        att_mat = att_mat.at[h * C:(h + 1) * C, H + h].set(params["att_dst"][h])
    w = params["W"].astype(jnp.float32)
    w_ext = jnp.concatenate([w, w @ att_mat], axis=1).astype(jnp.bfloat16)

    # --- kernel 1: projection + logit contributions (bf16 MXU, f32 accumulate) ---
    xl, a = _project(x_pad, w_ext, H * C, 2 * H, tm=tm)
    a_srcT = a[:, :H].T                    # [H, n_pad]
    a_dst = a[:, H:]                       # [n_pad, H]

    bias_pad = jnp.zeros((1, out_pad), jnp.float32).at[:, :out_dim].set(
        params["bias"].reshape(1, out_dim))

    # --- kernel 2: tiled masked-softmax attention + aggregation + bias + ELU ---
    kernel = functools.partial(_gat_attn_kernel, heads=H, out_chnl=C,
                               concat=concat, bf16_exp=_use_bf16_exp())
    cost = pl.CostEstimate(
        flops=2 * H * n_pad * n_pad * C + 8 * H * n_pad * n_pad,
        transcendentals=H * n_pad * n_pad + n_pad * out_pad,
        bytes_accessed=(n_pad * n_pad                  # int8 adjacency
                        + 2 * n_pad * H * C * gi       # bf16 xl re-read per dst tile
                        + 4 * n_pad * out_pad          # output
                        + 4 * n_pad * 3 * H * gi))     # logit contributions
    # TODO(synk): if profiling shows the adj/xl DMA exposed on v5e, sweep
    # pipeline_mode=pl.Buffered(3) on those two BlockSpecs.
    out = pl.pallas_call(
        kernel,
        out_shape=jax.ShapeDtypeStruct((n_pad, out_pad), jnp.float32),
        grid_spec=pltpu.PrefetchScalarGridSpec(
            num_scalar_prefetch=1,
            grid=(gi, gk),
            in_specs=[
                pl.BlockSpec((tm, H), lambda i, k, nnz: (i, 0)),       # a_dst
                pl.BlockSpec((H, tk), lambda i, k, nnz: (0, k)),       # a_src^T
                pl.BlockSpec((tm, tk), lambda i, k, nnz: (i, k)),      # adjacency int8
                pl.BlockSpec((tk, H * C), lambda i, k, nnz: (k, 0)),   # xl (bf16)
                pl.BlockSpec((1, out_pad), lambda i, k, nnz: (0, 0)),  # bias (padded)
            ],
            out_specs=pl.BlockSpec((tm, out_pad), lambda i, k, nnz: (i, 0)),
            scratch_shapes=[
                pltpu.VMEM((tm, H), jnp.float32),        # running max
                pltpu.VMEM((tm, H), jnp.float32),        # running sum
                pltpu.VMEM((tm, hc_pad), jnp.float32),   # lane-dense accumulator
            ]),
        compiler_params=pltpu.CompilerParams(
            dimension_semantics=("parallel", "arbitrary")),
        cost_estimate=cost,
    )(nnz, a_dst, a_srcT, adj, xl, bias_pad)

    return out[:N, :out_dim]


def init_params(key, in_chnl, out_chnl, heads, concat):
    """Deterministic synthetic GATConv parameters (glorot-ish scaling)."""
    k1, k2, k3 = jax.random.split(key, 3)
    H, C = heads, out_chnl
    W = jax.random.normal(k1, (in_chnl, H * C), jnp.float32) / jnp.sqrt(
        jnp.float32(in_chnl))
    att_src = jax.random.normal(k2, (H, C), jnp.float32) * 0.1
    att_dst = jax.random.normal(k3, (H, C), jnp.float32) * 0.1
    out_dim = H * C if concat else C
    bias = jnp.zeros((1, out_dim), jnp.float32)
    return {"W": W, "att_src": att_src, "att_dst": att_dst, "bias": bias}


def _gat_reference(h_node, edge_index, params, *, heads, out_chnl, concat):
    """Pure-JAX dense f32 reference (same math as GATConv + ELU, eval mode)."""
    N = h_node.shape[0]
    H, C = heads, out_chnl
    loops = jnp.arange(N, dtype=edge_index.dtype)
    ei = jnp.concatenate([edge_index, jnp.stack([loops, loops])], axis=1)
    src, dst = ei[0], ei[1]
    adj = jnp.zeros((N, N), jnp.float32).at[dst, src].set(1.0)
    xl = (h_node.astype(jnp.float32) @ params["W"]).reshape(N, H, C)
    a_src = jnp.sum(xl * params["att_src"][None], axis=-1)     # [N, H]
    a_dst = jnp.sum(xl * params["att_dst"][None], axis=-1)     # [N, H]
    e = a_dst.T[:, :, None] + a_src.T[:, None, :]              # [H, N, N]
    e = jnp.where(e > 0, e, _LEAKY_SLOPE * e)
    e = jnp.where((adj > 0)[None], e, -jnp.inf)
    alpha = jax.nn.softmax(e, axis=-1)
    out_h = jnp.einsum('hij,hjc->hic', alpha, jnp.transpose(xl, (1, 0, 2)))
    if concat:
        out = jnp.transpose(out_h, (1, 0, 2)).reshape(N, H * C)
    else:
        out = jnp.mean(out_h, axis=0)
    out = out + params["bias"]
    return jnp.where(out > 0, out, jnp.exp(out) - 1.0)


if __name__ == "__main__":
    # Small GATlayer-consistent shapes.  N=200 (not a tile multiple) exercises the
    # padded-row/col path; tile_src=128 forces a (2,2) grid so the online softmax
    # accumulates across multiple src tiles and the nnz-based block skip is live.
    N, IN_CHNL, OUT_CHNL, HEADS, CONCAT = 200, 16, 32, 2, True

    key = jax.random.PRNGKey(0)
    k_x, k_p = jax.random.split(key)
    h_node = jax.random.normal(k_x, (N, IN_CHNL), jnp.float32)

    # Bidirectional ring graph: 2N directed edges.
    fwd_src = jnp.arange(N, dtype=jnp.int32)
    fwd_dst = (fwd_src + 1) % N
    edge_index = jnp.stack([
        jnp.concatenate([fwd_src, fwd_dst]),
        jnp.concatenate([fwd_dst, fwd_src]),
    ])  # [2, 2N]

    params = init_params(k_p, IN_CHNL, OUT_CHNL, HEADS, CONCAT)

    out = gat_layer(h_node, edge_index, params, heads=HEADS, out_chnl=OUT_CHNL,
                    concat=CONCAT, tile_src=128)
    jax.block_until_ready(out)

    expected_dim = HEADS * OUT_CHNL if CONCAT else OUT_CHNL
    assert out.shape == (N, expected_dim), out.shape
    assert bool(jnp.all(jnp.isfinite(out)))

    ref = _gat_reference(h_node, edge_index, params, heads=HEADS,
                         out_chnl=OUT_CHNL, concat=CONCAT)
    max_err = float(jnp.max(jnp.abs(out - ref)))
    # bf16 MXU operands (f32 accumulation) + approx reciprocal vs an f32 reference:
    # expect ~1e-2-scale absolute error.
    assert max_err < 1e-1, max_err
    print("KERNEL_OK")
</pallas_src>

<mosaic_0001>
module attributes {stable_mosaic.version = 11 : i64} {
  func.func @_proj_kernel(%arg0: i32, %arg1: memref<128x16xf32, #tpu.memory_space<vmem>>, %arg2: memref<16x68xbf16, #tpu.memory_space<vmem>>, %arg3: memref<128x64xbf16, #tpu.memory_space<vmem>>, %arg4: memref<128x4xf32, #tpu.memory_space<vmem>>) attributes {dimension_semantics = [#tpu.dimension_semantics<parallel>], iteration_bounds = array<i64: 2>, scalar_prefetch = 0 : i64, scratch_operands = 0 : i64, tpu.core_type = #tpu.core_type<tc>, window_params = [{transform_indices = @transform_0, window_bounds = array<i64: 128, 16>}, {pipeline_mode = #tpu.pipeline_mode<synchronous>, transform_indices = @transform_1, window_bounds = array<i64: 16, 68>}, {transform_indices = @transform_2, window_bounds = array<i64: 128, 64>}, {transform_indices = @transform_3, window_bounds = array<i64: 128, 4>}]} {
    %c0 = arith.constant 0 : index
    %c0_0 = arith.constant 0 : index
    %0 = vector.load %arg1[%c0, %c0_0] : memref<128x16xf32, #tpu.memory_space<vmem>>, vector<128x16xf32>
    %1 = arith.truncf %0 : vector<128x16xf32> to vector<128x16xbf16>
    %c0_1 = arith.constant 0 : index
    %c0_2 = arith.constant 0 : index
    %2 = vector.load %arg2[%c0_1, %c0_2] : memref<16x68xbf16, #tpu.memory_space<vmem>>, vector<16x68xbf16>
    %cst = arith.constant dense<0.000000e+00> : vector<128x68xf32>
    %3 = tpu.matmul %1, %2, %cst {dimension_numbers = #tpu.dot_dimension_numbers<[1], [0], [0], [1], [0, 0, 1, 1], [], []>} : vector<128x16xbf16>, vector<16x68xbf16>, vector<128x68xf32> -> vector<128x68xf32>
    %4 = vector.extract_strided_slice %3 {offsets = [0, 0], sizes = [128, 64], strides = [1, 1]} : vector<128x68xf32> to vector<128x64xf32>
    %5 = arith.truncf %4 : vector<128x64xf32> to vector<128x64xbf16>
    %c0_3 = arith.constant 0 : index
    %c0_4 = arith.constant 0 : index
    %6 = vector.load %arg3[%c0_3, %c0_4] : memref<128x64xbf16, #tpu.memory_space<vmem>>, vector<128x64xbf16>
    tpu.vector_store %arg3[%c0_3, %c0_4], %5 {strides = array<i32>} : memref<128x64xbf16, #tpu.memory_space<vmem>>, vector<128x64xbf16>,
    %7 = vector.extract_strided_slice %3 {offsets = [0, 64], sizes = [128, 4], strides = [1, 1]} : vector<128x68xf32> to vector<128x4xf32>
    %c0_5 = arith.constant 0 : index
    %c0_6 = arith.constant 0 : index
    %8 = vector.load %arg4[%c0_5, %c0_6] : memref<128x4xf32, #tpu.memory_space<vmem>>, vector<128x4xf32>
    tpu.vector_store %arg4[%c0_5, %c0_6], %7 {strides = array<i32>} : memref<128x4xf32, #tpu.memory_space<vmem>>, vector<128x4xf32>,
    return
  }
  func.func @transform_0(%arg0: i32) -> (i32, i32) {
    %c0_i32 = arith.constant 0 : i32
    %c0_i32_0 = arith.constant 0 : i32
    return %arg0, %c0_i32 : i32, i32
  }
  func.func @transform_1(%arg0: i32) -> (i32, i32) {
    %c0_i32 = arith.constant 0 : i32
    %c0_i32_0 = arith.constant 0 : i32
    %c0_i32_1 = arith.constant 0 : i32
    return %c0_i32, %c0_i32_0 : i32, i32
  }
  func.func @transform_2(%arg0: i32) -> (i32, i32) {
    %c0_i32 = arith.constant 0 : i32
    %c0_i32_0 = arith.constant 0 : i32
    return %arg0, %c0_i32 : i32, i32
  }
  func.func @transform_3(%arg0: i32) -> (i32, i32) {
    %c0_i32 = arith.constant 0 : i32
    %c0_i32_0 = arith.constant 0 : i32
    return %arg0, %c0_i32 : i32, i32
  }
}

</mosaic_0001>

<llo_original>
// kernel: tpu_custom_call.1
$region0: #{tpu_custom_call.1}
  #allocation0 [shape = 'u32[]', space=smem, size = 0x4, offset = 0x4, fixed_abs, tag = 'smem constant byte address 0x4 - core index']
  #allocation1 [shape = 'u32[144,128]{1,0:T(1,128)}', space=vmem, size = 0x12000, scoped, tag = 'internal scratch']
  %s0 = inlined_call_operand.vmem [shape: f32[256,16], index: 0, kind: input, shape index: {}]
  %s1 = inlined_call_operand.vmem [shape: bf16[16,68], index: 1, kind: input, shape index: {}]
  %s2 = inlined_call_operand.vmem [shape: bf16[256,64], index: 2, kind: output, shape index: {0}]
  %s3 = inlined_call_operand.vmem [shape: f32[256,4], index: 3, kind: output, shape index: {1}]
  %4 = xla_tuple %s2, %s3
  %s5 = sld [smem:[#allocation0]]
  $region49: #{tpu_custom_call.1} parent=0
    _
  %s7 = ssub.s32 1, %s5
  %s8 = scalar_select 0, %s7, %s5
  loop: start=0, step=1, limit=4
  $region2: #{tpu_custom_call.1} parent=0 // loop_pre_header
    _
  $region3: #{tpu_custom_call.1} parent=0 // loop_header
    %s10 = sphi 0, %s14
    %p11 = scmp.ge.s32.totalorder %s10, 4
    %s20 = sphi 0, %s22
    %s23 = sphi 0, %s20
    %s24 = sphi 0, %s23
    %s40 = sphi 0, %s24
    %s44 = sphi 0, %s44
    %s46 = sphi 0, %s44
    %s47 = sphi 0, %s46
    %s61 = sphi 0, %s47
    %s67 = sphi 0, %s69
    %s70 = sphi 0, %s67
    %s71 = sphi 0, %s70
    %s87 = sphi 0, %s71
    %s93 = sphi 0, %s95
    %s96 = sphi 0, %s93
    %s97 = sphi 0, %s96
    %s113 = sphi 0, %s97
  $region4: #{tpu_custom_call.1} parent=0 // loop_header_branch
    %13 = sbr.rel (%p11) target = $region8
  $region5: #{tpu_custom_call.1} parent=0 // loop_body
    %s15 = ssub.s32 %s10, 1
    %s16 = ssub.s32 %s10, 2
    %s17 = sadd.s32 %s10, 1
    %s18 = ssub.s32 %s10, %s17
    %p19 = scmp.eq.s32.totalorder %s18, 0
    %s21 = sadd.s32 %s20, 1
    %s22 = scalar_select %p19, %s20, %s21
    %p25 = pneg %p19
    %p26 = scmp.eq.s32.totalorder %s10, 1
    %p27 = por %p25, %p26
    %p28 = scmp.ne.s32.totalorder %s20, %s23
    %p29 = scmp.eq.s32.totalorder %s10, 0
    %p30 = por %p28, %p29
    %p31 = scmp.ne.s32.totalorder %s20, %s23
    %p32 = scmp.eq.s32.totalorder %s15, 1
    %p33 = por %p31, %p32
    %p34 = scmp.ne.s32.totalorder %s23, %s24
    %p35 = scmp.eq.s32.totalorder %s15, 0
    %p36 = por %p34, %p35
    %p37 = scmp.ne.s32.totalorder %s23, %s24
    %p38 = scmp.eq.s32.totalorder %s16, 1
    %p39 = por %p37, %p38
    %p41 = scmp.ne.s32.totalorder %s24, %s40
    %p42 = scmp.eq.s32.totalorder %s16, 0
    %p43 = por %p41, %p42
    %s45 = sadd.s32 %s44, 1
    %p48 = scmp.eq.s32.totalorder %s10, 1
    %p49 = scmp.ne.s32.totalorder %s44, %s46
    %p50 = scmp.eq.s32.totalorder %s10, 0
    %p51 = por %p49, %p50
    %p52 = scmp.ne.s32.totalorder %s44, %s46
    %p53 = scmp.eq.s32.totalorder %s15, 1
    %p54 = por %p52, %p53
    %p55 = scmp.ne.s32.totalorder %s46, %s47
    %p56 = scmp.eq.s32.totalorder %s15, 0
    %p57 = por %p55, %p56
    %p58 = scmp.ne.s32.totalorder %s46, %s47
    %p59 = scmp.eq.s32.totalorder %s16, 1
    %p60 = por %p58, %p59
    %p62 = scmp.ne.s32.totalorder %s47, %s61
    %p63 = scmp.eq.s32.totalorder %s16, 0
    %p64 = por %p62, %p63
    %s65 = ssub.s32 %s10, %s17
    %p66 = scmp.eq.s32.totalorder %s65, 0
    %s68 = sadd.s32 %s67, 1
    %s69 = scalar_select %p66, %s67, %s68
    %p72 = pneg %p66
    %p73 = scmp.eq.s32.totalorder %s10, 1
    %p74 = por %p72, %p73
    %p75 = scmp.ne.s32.totalorder %s67, %s70
    %p76 = scmp.eq.s32.totalorder %s10, 0
    %p77 = por %p75, %p76
    %p78 = scmp.ne.s32.totalorder %s67, %s70
    %p79 = scmp.eq.s32.totalorder %s15, 1
    %p80 = por %p78, %p79
    %p81 = scmp.ne.s32.totalorder %s70, %s71
    %p82 = scmp.eq.s32.totalorder %s15, 0
    %p83 = por %p81, %p82
    %p84 = scmp.ne.s32.totalorder %s70, %s71
    %p85 = scmp.eq.s32.totalorder %s16, 1
    %p86 = por %p84, %p85
    %p88 = scmp.ne.s32.totalorder %s71, %s87
    %p89 = scmp.eq.s32.totalorder %s16, 0
    %p90 = por %p88, %p89
    %s91 = ssub.s32 %s10, %s17
    %p92 = scmp.eq.s32.totalorder %s91, 0
    %s94 = sadd.s32 %s93, 1
    %s95 = scalar_select %p92, %s93, %s94
    %p98 = pneg %p92
    %p99 = scmp.eq.s32.totalorder %s10, 1
    %p100 = por %p98, %p99
    %p101 = scmp.ne.s32.totalorder %s93, %s96
    %p102 = scmp.eq.s32.totalorder %s10, 0
    %p103 = por %p101, %p102
    %p104 = scmp.ne.s32.totalorder %s93, %s96
    %p105 = scmp.eq.s32.totalorder %s15, 1
    %p106 = por %p104, %p105
    %p107 = scmp.ne.s32.totalorder %s96, %s97
    %p108 = scmp.eq.s32.totalorder %s15, 0
    %p109 = por %p107, %p108
    %p110 = scmp.ne.s32.totalorder %s96, %s97
    %p111 = scmp.eq.s32.totalorder %s16, 1
    %p112 = por %p110, %p111
    %p114 = scmp.ne.s32.totalorder %s97, %s113
    %p115 = scmp.eq.s32.totalorder %s16, 0
    %p116 = por %p114, %p115
    %p117 = scmp.le.s32.totalorder 1, %s10
    %p118 = scmp.lt.s32.totalorder %s10, 3
    %p119 = pnand %p117, %p118
    %p120 = pneg %p119
    // Predicated region
    $region9: #{tpu_custom_call.1} parent=5 // pred_check
      _
    $region10: #{tpu_custom_call.1} parent=5 // pred_check_branch
      %122 = sbr.rel (%p119) target = $region12
    $region11: #{tpu_custom_call.1} parent=5 // pred_region
      %s123 = ssub.s32 %s10, 1
      // Predicated region
      $region13: #{tpu_custom_call.1} parent=11 // pred_check
        %p124 = pneg %p57
      $region14: #{tpu_custom_call.1} parent=11 // pred_check_branch
        %126 = sbr.rel (%p124) target = $region16
      $region15: #{tpu_custom_call.1} parent=11 // pred_region
        _
      $region16: #{tpu_custom_call.1} parent=11 // pred_fallthru
        _
    $region12: #{tpu_custom_call.1} parent=5 // pred_fallthru
      _
    %p127 = scmp.lt.s32.totalorder %s10, 2
    // Predicated region
    $region17: #{tpu_custom_call.1} parent=5 // pred_check
      %p128 = pneg %p127
    $region18: #{tpu_custom_call.1} parent=5 // pred_check_branch
      %130 = sbr.rel (%p128) target = $region20
    $region19: #{tpu_custom_call.1} parent=5 // pred_region
      // Predicated region
      $region21: #{tpu_custom_call.1} parent=19 // pred_check
        %p131 = pneg %p30
      $region22: #{tpu_custom_call.1} parent=19 // pred_check_branch
        %133 = sbr.rel (%p131) target = $region24
      $region23: #{tpu_custom_call.1} parent=19 // pred_region
        %s134 = smul.u32 16, %s10
        %p135 = scmp.lt.s32.totalorder %s134, 31
        %s136 = scalar_select %p135, %s134, 31
        %s137 = smul.addr %s136, 8
        %s138 = scalar_lea.vmem %s0, %s137
        %s139 = smul.u32 16, %s10
      $region24: #{tpu_custom_call.1} parent=19 // pred_fallthru
        _
    $region20: #{tpu_custom_call.1} parent=5 // pred_fallthru
      _
    %p140 = scmp.le.s32.totalorder 1, %s10
    %p141 = scmp.lt.s32.totalorder %s10, 3
    %p142 = pnand %p140, %p141
    %p143 = pneg %p142
    // Predicated region
    $region25: #{tpu_custom_call.1} parent=5 // pred_check
      _
    $region26: #{tpu_custom_call.1} parent=5 // pred_check_branch
      %145 = sbr.rel (%p142) target = $region28
    $region27: #{tpu_custom_call.1} parent=5 // pred_region
      %s146 = ssub.s32 %s10, 1
      %s147 = smul.u32 16, %s15
      %p148 = scmp.lt.s32.totalorder %s147, 31
      %s149 = scalar_select %p148, %s147, 31
      %s150 = smul.addr %s149, 8
      %s151 = scalar_lea.vmem %s0, %s150
      %p152 = pneg %p36
      %p153 = pneg %p33
      %p154 = pneg %p57
      %p155 = pneg %p54
      %p156 = pneg %p83
      %p157 = pneg %p80
      %s158 = smul.u32 16, %s15
      %p159 = scmp.lt.s32.totalorder %s158, 31
      %s160 = scalar_select %p159, %s158, 31
      %s161 = smul.addr %s160, 4
      %s162 = scalar_lea.vmem %s2, %s161
      %p163 = pneg %p109
      %p164 = pneg %p106
      %s165 = smul.u32 16, %s15
      %p166 = scmp.lt.s32.totalorder %s165, 31
      %s167 = scalar_select %p166, %s165, 31
      %s168 = smul.addr %s167, 8
      %s169 = scalar_lea.vmem %s3, %s168
      %s170 = smul.u32 16, %s15
      %p171 = scmp.lt.s32.totalorder %s170, 31
      %s172 = scalar_select %p171, %s170, 31
      %s173 = smul.addr %s172, 8
      %s174 = scalar_lea.vmem %s0, %s173
      %s175 = smul.u32 16, %s15
      %s176 = smul.u32 16, %s15
      %p177 = scmp.lt.s32.totalorder %s176, 31
      %s178 = scalar_select %p177, %s176, 31
      %s179 = smul.addr %s178, 4
      %s180 = scalar_lea.vmem %s2, %s179
      %s181 = smul.u32 16, %s15
      %s182 = smul.u32 16, %s15
      %p183 = scmp.lt.s32.totalorder %s182, 31
      %s184 = scalar_select %p183, %s182, 31
      %s185 = smul.addr %s184, 8
      %s186 = scalar_lea.vmem %s3, %s185
      %s187 = smul.u32 16, %s15
      %v189 = vld [vmem:[%s174] sm:$0xff]
      %v190 = vld [vmem:[%s174 + $0x8] sm:$0xff]
      %v191 = vld [vmem:[%s174 + $0x10] sm:$0xff]
      %v192 = vld [vmem:[%s174 + $0x18] sm:$0xff]
      %v193 = vld [vmem:[%s174 + $0x20] sm:$0xff]
      %v194 = vld [vmem:[%s174 + $0x28] sm:$0xff]
      %v195 = vld [vmem:[%s174 + $0x30] sm:$0xff]
      %v196 = vld [vmem:[%s174 + $0x38] sm:$0xff]
      %v197 = vld [vmem:[%s174 + $0x40] sm:$0xff]
      %v198 = vld [vmem:[%s174 + $0x48] sm:$0xff]
      %v199 = vld [vmem:[%s174 + $0x50] sm:$0xff]
      %v200 = vld [vmem:[%s174 + $0x58] sm:$0xff]
      %v201 = vld [vmem:[%s174 + $0x60] sm:$0xff]
      %v202 = vld [vmem:[%s174 + $0x68] sm:$0xff]
      %v203 = vld [vmem:[%s174 + $0x70] sm:$0xff]
      %v204 = vld [vmem:[%s174 + $0x78] sm:$0xff]
      %v205 = vpack.c.bf16 %v190, %v189
      %v206 = vpack.c.bf16 %v192, %v191
      %v207 = vpack.c.bf16 %v194, %v193
      %v208 = vpack.c.bf16 %v196, %v195
      %v209 = vpack.c.bf16 %v198, %v197
      %v210 = vpack.c.bf16 %v200, %v199
      %v211 = vpack.c.bf16 %v202, %v201
      %v212 = vpack.c.bf16 %v204, %v203
      %v213 = vld [vmem:[%s1] sm:$0xf]
      %v214 = vld [vmem:[%s1 + $0x4] sm:$0xf]
      %v217 = vunpack.c.l.b16 %v213
      %v218 = vunpack.c.l.b16 %v214
      %v219 = vpack.c.b16 %v218, %v217
      %vm221 = vcmask 130048
      %v223 = vsel %vm221, %v205, 0
      %v226 = vsel %vm221, %v206, 0
      %v229 = vsel %vm221, %v207, 0
      %v232 = vsel %vm221, %v208, 0
      %v235 = vsel %vm221, %v209, 0
      %v238 = vsel %vm221, %v210, 0
      %v241 = vsel %vm221, %v211, 0
      %v244 = vsel %vm221, %v212, 0
      %246 = vmatprep.subr.bf16.mxu0 0
      %247 = vmatpush1.bf16.msra.mxu0 %v219
      %248 = vmatprep.subr.bf16.mxu0 0
      %249 = vmatpush1.bf16.msra.mxu0 0
      %250 = vmatprep.subr.bf16.mxu0 0
      %251 = vmatpush1.bf16.msra.mxu0 0
      %252 = vmatprep.subr.bf16.mxu0 0
      %253 = vmatpush1.bf16.msra.mxu0 0
      %254 = vmatprep.subr.bf16.mxu0 0
      %255 = vmatpush1.bf16.msra.mxu0 0
      %256 = vmatprep.subr.bf16.mxu0 0
      %257 = vmatpush1.bf16.msra.mxu0 0
      %258 = vmatprep.subr.bf16.mxu0 0
      %259 = vmatpush1.bf16.msra.mxu0 0
      %260 = vmatprep.subr.bf16.mxu0 0
      %261 = vmatpush1.bf16.msra.mxu0 0
      %262 = vmatprep.subr.bf16.mxu0 0
      %263 = vmatpush1.bf16.msra.mxu0 0
      %264 = vmatprep.subr.bf16.mxu0 0
      %265 = vmatpush1.bf16.msra.mxu0 0
      %266 = vmatprep.subr.bf16.mxu0 0
      %267 = vmatpush1.bf16.msra.mxu0 0
      %268 = vmatprep.subr.bf16.mxu0 0
      %269 = vmatpush1.bf16.msra.mxu0 0
      %270 = vmatprep.subr.bf16.mxu0 0
      %271 = vmatpush1.bf16.msra.mxu0 0
      %272 = vmatprep.subr.bf16.mxu0 0
      %273 = vmatpush1.bf16.msra.mxu0 0
      %274 = vmatprep.subr.bf16.mxu0 0
      %275 = vmatpush1.bf16.msra.mxu0 0
      %276 = vmatprep.subr.bf16.mxu0 0
      %277 = vmatpush1.bf16.msra.mxu0 0
      %278 = vmatprep.mubr.bf16.mxu0 0
      %279 = vmatmul.mubr.bf16.gmra.mrb[0].mxu0 %v223
      %v280 = vpop.f32.mrb[0].mxu0
      %v281 = vadd.f32 0.0, %v280
      %v282 = vpop.f32.mrb[0].mxu0
      %v283 = vpop.f32.mrb[0].mxu0
      %v284 = vadd.f32 0.0, %v283
      %v285 = vpop.f32.mrb[0].mxu0
      %286 = vmatprep.mubr.bf16.mxu0 0
      %287 = vmatmul.mubr.bf16.gmra.mrb[0].mxu0 %v226
      %v288 = vpop.f32.mrb[0].mxu0
      %v289 = vadd.f32 0.0, %v288
      %v290 = vpop.f32.mrb[0].mxu0
      %v291 = vpop.f32.mrb[0].mxu0
      %v292 = vadd.f32 0.0, %v291
      %v293 = vpop.f32.mrb[0].mxu0
      %294 = vmatprep.mubr.bf16.mxu0 0
      %295 = vmatmul.mubr.bf16.gmra.mrb[0].mxu0 %v229
      %v296 = vpop.f32.mrb[0].mxu0
      %v297 = vadd.f32 0.0, %v296
      %v298 = vpop.f32.mrb[0].mxu0
      %v299 = vpop.f32.mrb[0].mxu0
      %v300 = vadd.f32 0.0, %v299
      %v301 = vpop.f32.mrb[0].mxu0
      %302 = vmatprep.mubr.bf16.mxu0 0
      %303 = vmatmul.mubr.bf16.gmra.mrb[0].mxu0 %v232
      %v304 = vpop.f32.mrb[0].mxu0
      %v305 = vadd.f32 0.0, %v304
      %v306 = vpop.f32.mrb[0].mxu0
      %v307 = vpop.f32.mrb[0].mxu0
      %v308 = vadd.f32 0.0, %v307
      %v309 = vpop.f32.mrb[0].mxu0
      %310 = vmatprep.mubr.bf16.mxu0 0
      %311 = vmatmul.mubr.bf16.gmra.mrb[0].mxu0 %v235
      %v312 = vpop.f32.mrb[0].mxu0
      %v313 = vadd.f32 0.0, %v312
      %v314 = vpop.f32.mrb[0].mxu0
      %v315 = vpop.f32.mrb[0].mxu0
      %v316 = vadd.f32 0.0, %v315
      %v317 = vpop.f32.mrb[0].mxu0
      %318 = vmatprep.mubr.bf16.mxu0 0
      %319 = vmatmul.mubr.bf16.gmra.mrb[0].mxu0 %v238
      %v320 = vpop.f32.mrb[0].mxu0
      %v321 = vadd.f32 0.0, %v320
      %v322 = vpop.f32.mrb[0].mxu0
      %v323 = vpop.f32.mrb[0].mxu0
      %v324 = vadd.f32 0.0, %v323
      %v325 = vpop.f32.mrb[0].mxu0
      %326 = vmatprep.mubr.bf16.mxu0 0
      %327 = vmatmul.mubr.bf16.gmra.mrb[0].mxu0 %v241
      %v328 = vpop.f32.mrb[0].mxu0
      %v329 = vadd.f32 0.0, %v328
      %v330 = vpop.f32.mrb[0].mxu0
      %v331 = vpop.f32.mrb[0].mxu0
      %v332 = vadd.f32 0.0, %v331
      %v333 = vpop.f32.mrb[0].mxu0
      %334 = vmatprep.mubr.bf16.mxu0 0
      %335 = vmatmul.mubr.bf16.gmra.mrb[0].mxu0 %v244
      %v336 = vpop.f32.mrb[0].mxu0
      %v337 = vadd.f32 0.0, %v336
      %v338 = vpop.f32.mrb[0].mxu0
      %v339 = vpop.f32.mrb[0].mxu0
      %v340 = vadd.f32 0.0, %v339
      %v341 = vpop.f32.mrb[0].mxu0
      %342 = vdwg.mxu0
      %v343 = vpack.c.bf16 %v284, %v281
      %v344 = vpack.c.bf16 %v292, %v289
      %v345 = vpack.c.bf16 %v300, %v297
      %v346 = vpack.c.bf16 %v308, %v305
      %v347 = vpack.c.bf16 %v316, %v313
      %v348 = vpack.c.bf16 %v324, %v321
      %v349 = vpack.c.bf16 %v332, %v329
      %v350 = vpack.c.bf16 %v340, %v337
      %v359 = vunpack.c.l.b16 %v343
      %v360 = vunpack.c.h.b16 %v343
      %v361 = vunpack.c.l.b16 %v344
      %v362 = vunpack.c.h.b16 %v344
      %v363 = vunpack.c.l.b16 %v345
      %v364 = vunpack.c.h.b16 %v345
      %v365 = vunpack.c.l.b16 %v346
      %v366 = vunpack.c.h.b16 %v346
      %v367 = vunpack.c.l.b16 %v347
      %v368 = vunpack.c.h.b16 %v347
      %v369 = vunpack.c.l.b16 %v348
      %v370 = vunpack.c.h.b16 %v348
      %v371 = vunpack.c.l.b16 %v349
      %v372 = vunpack.c.h.b16 %v349
      %v373 = vunpack.c.l.b16 %v350
      %v374 = vunpack.c.h.b16 %v350
      %v375 = vpack.c.b16 %v359, %v359
      %v376 = vpack.c.b16 %v360, %v360
      %v377 = vpack.c.b16 %v361, %v361
      %v378 = vpack.c.b16 %v362, %v362
      %v379 = vpack.c.b16 %v363, %v363
      %v380 = vpack.c.b16 %v364, %v364
      %v381 = vpack.c.b16 %v365, %v365
      %v382 = vpack.c.b16 %v366, %v366
      %v383 = vpack.c.b16 %v367, %v367
      %v384 = vpack.c.b16 %v368, %v368
      %v385 = vpack.c.b16 %v369, %v369
      %v386 = vpack.c.b16 %v370, %v370
      %v387 = vpack.c.b16 %v371, %v371
      %v388 = vpack.c.b16 %v372, %v372
      %v389 = vpack.c.b16 %v373, %v373
      %v390 = vpack.c.b16 %v374, %v374
      %vm407 = vcmask 519168
      %408 = vst.msk [vmem:[%s180] sm:$0xf] %vm407, %v375
      %409 = vst.msk [vmem:[%s180 + $0x4] sm:$0xf] %vm407, %v376
      %410 = vst.msk [vmem:[%s180 + $0x8] sm:$0xf] %vm407, %v377
      %411 = vst.msk [vmem:[%s180 + $0xc] sm:$0xf] %vm407, %v378
      %412 = vst.msk [vmem:[%s180 + $0x10] sm:$0xf] %vm407, %v379
      %413 = vst.msk [vmem:[%s180 + $0x14] sm:$0xf] %vm407, %v380
      %414 = vst.msk [vmem:[%s180 + $0x18] sm:$0xf] %vm407, %v381
      %415 = vst.msk [vmem:[%s180 + $0x1c] sm:$0xf] %vm407, %v382
      %416 = vst.msk [vmem:[%s180 + $0x20] sm:$0xf] %vm407, %v383
      %417 = vst.msk [vmem:[%s180 + $0x24] sm:$0xf] %vm407, %v384
      %418 = vst.msk [vmem:[%s180 + $0x28] sm:$0xf] %vm407, %v385
      %419 = vst.msk [vmem:[%s180 + $0x2c] sm:$0xf] %vm407, %v386
      %420 = vst.msk [vmem:[%s180 + $0x30] sm:$0xf] %vm407, %v387
      %421 = vst.msk [vmem:[%s180 + $0x34] sm:$0xf] %vm407, %v388
      %422 = vst.msk [vmem:[%s180 + $0x38] sm:$0xf] %vm407, %v389
      %423 = vst.msk [vmem:[%s180 + $0x3c] sm:$0xf] %vm407, %v390
      %440 = vrot.lane.b32.xlu0 %v281, 64
      %v441 = vpop.permute.xlu0 %440
      %442 = vrot.lane.b32.xlu0 %v284, 64
      %v443 = vpop.permute.xlu0 %442
      %444 = vrot.lane.b32.xlu0 %v289, 64
      %v445 = vpop.permute.xlu0 %444
      %446 = vrot.lane.b32.xlu0 %v292, 64
      %v447 = vpop.permute.xlu0 %446
      %448 = vrot.lane.b32.xlu0 %v297, 64
      %v449 = vpop.permute.xlu0 %448
      %450 = vrot.lane.b32.xlu0 %v300, 64
      %v451 = vpop.permute.xlu0 %450
      %452 = vrot.lane.b32.xlu0 %v305, 64
      %v453 = vpop.permute.xlu0 %452
      %454 = vrot.lane.b32.xlu0 %v308, 64
      %v455 = vpop.permute.xlu0 %454
      %456 = vrot.lane.b32.xlu0 %v313, 64
      %v457 = vpop.permute.xlu0 %456
      %458 = vrot.lane.b32.xlu0 %v316, 64
      %v459 = vpop.permute.xlu0 %458
      %460 = vrot.lane.b32.xlu0 %v321, 64
      %v461 = vpop.permute.xlu0 %460
      %462 = vrot.lane.b32.xlu0 %v324, 64
      %v463 = vpop.permute.xlu0 %462
      %464 = vrot.lane.b32.xlu0 %v329, 64
      %v465 = vpop.permute.xlu0 %464
      %466 = vrot.lane.b32.xlu0 %v332, 64
      %v467 = vpop.permute.xlu0 %466
      %468 = vrot.lane.b32.xlu0 %v337, 64
      %v469 = vpop.permute.xlu0 %468
      %470 = vrot.lane.b32.xlu0 %v340, 64
      %v471 = vpop.permute.xlu0 %470
      %vm488 = vcmask 31744
      %489 = vst.msk [vmem:[%s186] sm:$0xff] %vm488, %v441
      %490 = vst.msk [vmem:[%s186 + $0x8] sm:$0xff] %vm488, %v443
      %491 = vst.msk [vmem:[%s186 + $0x10] sm:$0xff] %vm488, %v445
      %492 = vst.msk [vmem:[%s186 + $0x18] sm:$0xff] %vm488, %v447
      %493 = vst.msk [vmem:[%s186 + $0x20] sm:$0xff] %vm488, %v449
      %494 = vst.msk [vmem:[%s186 + $0x28] sm:$0xff] %vm488, %v451
      %495 = vst.msk [vmem:[%s186 + $0x30] sm:$0xff] %vm488, %v453
      %496 = vst.msk [vmem:[%s186 + $0x38] sm:$0xff] %vm488, %v455
      %497 = vst.msk [vmem:[%s186 + $0x40] sm:$0xff] %vm488, %v457
      %498 = vst.msk [vmem:[%s186 + $0x48] sm:$0xff] %vm488, %v459
      %499 = vst.msk [vmem:[%s186 + $0x50] sm:$0xff] %vm488, %v461
      %500 = vst.msk [vmem:[%s186 + $0x58] sm:$0xff] %vm488, %v463
      %501 = vst.msk [vmem:[%s186 + $0x60] sm:$0xff] %vm488, %v465
      %502 = vst.msk [vmem:[%s186 + $0x68] sm:$0xff] %vm488, %v467
      %503 = vst.msk [vmem:[%s186 + $0x70] sm:$0xff] %vm488, %v469
      %504 = vst.msk [vmem:[%s186 + $0x78] sm:$0xff] %vm488, %v471
      %s505 = smul.u32 16, %s15
      %p506 = scmp.lt.s32.totalorder %s505, 31
      %s507 = scalar_select %p506, %s505, 31
      %s508 = smul.addr %s507, 4
      %s509 = scalar_lea.vmem %s2, %s508
      %s510 = smul.u32 16, %s15
      %p511 = scmp.lt.s32.totalorder %s510, 31
      %s512 = scalar_select %p511, %s510, 31
      %s513 = smul.addr %s512, 8
      %s514 = scalar_lea.vmem %s3, %s513
      // Predicated region
      $region29: #{tpu_custom_call.1} parent=27 // pred_check
        %p515 = pneg %p80
      $region30: #{tpu_custom_call.1} parent=27 // pred_check_branch
        %517 = sbr.rel (%p515) target = $region32
      $region31: #{tpu_custom_call.1} parent=27 // pred_region
        %s518 = smul.u32 16, %s15
      $region32: #{tpu_custom_call.1} parent=27 // pred_fallthru
        _
      // Predicated region
      $region33: #{tpu_custom_call.1} parent=27 // pred_check
        %p519 = pneg %p106
      $region34: #{tpu_custom_call.1} parent=27 // pred_check_branch
        %521 = sbr.rel (%p519) target = $region36
      $region35: #{tpu_custom_call.1} parent=27 // pred_region
        %s522 = smul.u32 16, %s15
      $region36: #{tpu_custom_call.1} parent=27 // pred_fallthru
        _
    $region28: #{tpu_custom_call.1} parent=5 // pred_fallthru
      _
    %p523 = scmp.le.s32.totalorder 2, %s10
    // Predicated region
    $region37: #{tpu_custom_call.1} parent=5 // pred_check
      %p524 = pneg %p523
    $region38: #{tpu_custom_call.1} parent=5 // pred_check_branch
      %526 = sbr.rel (%p524) target = $region40
    $region39: #{tpu_custom_call.1} parent=5 // pred_region
      %s527 = ssub.s32 %s10, 2
      // Predicated region
      $region41: #{tpu_custom_call.1} parent=39 // pred_check
        %p528 = pneg %p86
      $region42: #{tpu_custom_call.1} parent=39 // pred_check_branch
        %530 = sbr.rel (%p528) target = $region44
      $region43: #{tpu_custom_call.1} parent=39 // pred_region
        %s531 = smul.u32 16, %s16
        %p532 = scmp.lt.s32.totalorder %s531, 31
        %s533 = scalar_select %p532, %s531, 31
        %s534 = smul.addr %s533, 4
        %s535 = scalar_lea.vmem %s2, %s534
      $region44: #{tpu_custom_call.1} parent=39 // pred_fallthru
        _
      // Predicated region
      $region45: #{tpu_custom_call.1} parent=39 // pred_check
        %p536 = pneg %p112
      $region46: #{tpu_custom_call.1} parent=39 // pred_check_branch
        %538 = sbr.rel (%p536) target = $region48
      $region47: #{tpu_custom_call.1} parent=39 // pred_region
        %s539 = smul.u32 16, %s16
        %p540 = scmp.lt.s32.totalorder %s539, 31
        %s541 = scalar_select %p540, %s539, 31
        %s542 = smul.addr %s541, 8
        %s543 = scalar_lea.vmem %s3, %s542
      $region48: #{tpu_custom_call.1} parent=39 // pred_fallthru
        _
    $region40: #{tpu_custom_call.1} parent=5 // pred_fallthru
      _
  $region6: #{tpu_custom_call.1} parent=0 // loop_footer
    %s14 = sadd.s32 1, %s10
  $region7: #{tpu_custom_call.1} parent=0 // loop_footer_branch
    %9 = sbr.rel target = $region3
  $region8: #{tpu_custom_call.1} parent=0 // loop_exit
    _

</llo_original>
